<compile_context>
chip_gen: v6e
topology: v6e:2x2x1
jax: 0.10.0
libtpu: 0.0.40
codegen_flags: <defaults>
</compile_context>

<pallas_src>
import jax
import jax.numpy as jnp
from jax import lax
from jax.experimental import pallas as pl
from jax.experimental.pallas import tpu as pltpu


def _round_up(x, m):
    return ((x + m - 1) // m) * m


def _masked_nll_num_kernel(pred_ref, tgt_ref, scale_ref, num_ref):
    i = pl.program_id(1)      # row tile within this split
    j = pl.program_id(2)      # class tile

    @pl.when((i == 0) & (j == 0))
    def _():
        num_ref[...] = jnp.zeros_like(num_ref)

    pred = pred_ref[...]                       # (TN, CT), native dtype
    tn, ct = pred.shape

    # Class-tile offset on the tiny (TN,1) target keeps the iota loop-invariant.
    tgt_local = tgt_ref[...] - j * ct          # sentinel rows stay negative
    cols = lax.broadcasted_iota(jnp.int32, (tn, ct), 1)
    hit = cols == tgt_local                    # (TN, CT) one-hot (or all-False)

    # One-hot select (NaN-safe: false predicate never propagates pred), then
    # collapse lanes (XLU) before the tiny per-row scale multiply.
    sel = jnp.where(hit, pred, 0.0).astype(jnp.float32)
    rowsum = jnp.sum(sel, axis=-1, keepdims=True)          # (TN, 1)
    num_ref[...] = num_ref[...] + jnp.sum(rowsum * scale_ref[...])


def masked_nll_loss(pred, target, mask, weight=None, *, tile_n=2048,
                    c_tile=None, n_split=1, core_parallel=False):
    """pred: (N, C) log-probs; target: (N,) int; mask: (B, S) with B*S == N."""
    n, c = pred.shape
    itemsize = jnp.dtype(pred.dtype).itemsize

    target = target.reshape(n).astype(jnp.int32)
    mask_flat = mask.reshape(n).astype(jnp.float32)

    # Per-row scale and the denominator: O(N)/O(C) work, done in the wrapper.
    if weight is None:
        scale = mask_flat
    else:
        scale = jnp.asarray(weight, jnp.float32)[target] * mask_flat
    denom = jnp.sum(scale)      # NOTE: all-zero mask divides by zero, exactly
                                # like the PyTorch module.

    # Sentinel target = -1 for masked-out rows (and, below, padded rows):
    # it never matches a class column, so garbage/NaN pred is never selected.
    tgt_sent = jnp.where(mask_flat != 0.0, target, -1)

    # --- class tiling: largest divisor of C that's a multiple of 128, <= 8 K.
    if c_tile is None:
        c_tile = c
        if c > 8192:
            c_tile = 8192                     # ragged last class tile is safe
            if c % 128 == 0:
                for k in range(64, 0, -1):    # 64 * 128 == 8192
                    if c % (k * 128) == 0:
                        c_tile = k * 128
                        break
    c_tiles = pl.cdiv(c, c_tile)
    # TODO(synk): for vocab-scale C a DMA-gather variant (scalar-prefetch the
    # targets, fetch only the 128-lane slab holding each row's target column)
    # would cut HBM traffic ~C/128x; streaming is kept here for simplicity.

    # --- row tile: ~16 MiB per pred buffer (double-buffered ~32 MiB, fits
    # v7x's 64 MiB VMEM with headroom; v5e/v6e have 128 MiB).
    row_align = 8 if itemsize >= 4 else 16        # sublane packing for bf16
    max_rows = max(row_align, (16 * 1024 * 1024) // (c_tile * itemsize))
    tile_n = max(row_align, min(tile_n, max_rows, _round_up(n, row_align)))
    tile_n = (tile_n // row_align) * row_align

    valid_row_tiles = pl.cdiv(n, tile_n)
    n_split = max(1, min(n_split, valid_row_tiles))
    rpt = pl.cdiv(valid_row_tiles, n_split)       # row tiles per split
    n_pad = n_split * rpt * tile_n
    last_block = valid_row_tiles - 1

    # pred is NOT padded / copied; only the tiny per-row vectors are.
    pad = n_pad - n
    tgt_p = jnp.pad(tgt_sent, (0, pad), constant_values=-1).reshape(n_pad, 1)
    scale_p = jnp.pad(scale, (0, pad)).reshape(n_pad, 1)

    def pred_map(s, i, j):
        # Clamp duplicated/overhanging trailing tiles back in bounds; their
        # sentinel targets guarantee zero contribution.
        return (jnp.minimum(s * rpt + i, last_block), j)

    def row_map(s, i, j):
        return (s * rpt + i, 0)

    in_specs = [
        pl.BlockSpec((tile_n, c_tile), pred_map),
        pl.BlockSpec((tile_n, 1), row_map),
        pl.BlockSpec((tile_n, 1), row_map),
    ]

    # Per-split partial numerator as a lane-dense (1, 8, 128) resident block.
    out_spec = pl.BlockSpec((1, 8, 128), lambda s, i, j: (s, 0, 0))
    out_shape = jax.ShapeDtypeStruct((n_split, 8, 128), jnp.float32)

    if core_parallel:   # v7x: put the split axis on both TensorCores
        semantics = (pltpu.CORE_PARALLEL, pltpu.ARBITRARY, pltpu.ARBITRARY)
    else:
        semantics = ("parallel", "arbitrary", "arbitrary")

    num_out = pl.pallas_call(
        _masked_nll_num_kernel,
        out_shape=out_shape,
        grid_spec=pltpu.PrefetchScalarGridSpec(
            num_scalar_prefetch=0,
            grid=(n_split, rpt, c_tiles),
            in_specs=in_specs,
            out_specs=out_spec,
        ),
        compiler_params=pltpu.CompilerParams(
            dimension_semantics=semantics,
            vmem_limit_bytes=48 * 1024 * 1024,
        ),
        cost_estimate=pl.CostEstimate(
            flops=3 * n * c,
            transcendentals=0,
            bytes_accessed=n * c * itemsize + 8 * n_pad,
        ),
    )(pred, tgt_p, scale_p)

    num = jnp.sum(num_out[:, 0, 0])
    return (-num) / denom


def _reference_masked_nll(pred, target, mask, weight=None):
    pred = pred.astype(jnp.float32)
    mask_flat = mask.reshape(-1).astype(jnp.float32)
    gathered = jnp.take_along_axis(
        pred, target[:, None].astype(jnp.int32), axis=1)[:, 0]
    if weight is None:
        return -jnp.sum(mask_flat * gathered) / jnp.sum(mask_flat)
    wt = weight.astype(jnp.float32)[target]
    return -jnp.sum(wt * mask_flat * gathered) / jnp.sum(wt * mask_flat)


if __name__ == "__main__":
    key = jax.random.PRNGKey(0)

    def check(batch, seq_len, n_classes, dtype, weighted, **kw):
        sub = jax.random.fold_in(key, batch * 1000 + seq_len * 37 + n_classes)
        k1, k2, k3 = jax.random.split(sub, 3)
        logits = jax.random.normal(k1, (batch * seq_len, n_classes), jnp.float32)
        pred = jax.nn.log_softmax(logits, axis=-1).astype(dtype)
        target = jax.random.randint(k2, (batch * seq_len,), 0, n_classes, jnp.int32)
        mask = (jax.random.uniform(k3, (batch, seq_len)) > 0.3).astype(jnp.float32)
        w = jnp.linspace(0.5, 1.5, n_classes).astype(jnp.float32) if weighted else None
        out = jax.block_until_ready(masked_nll_loss(pred, target, mask, weight=w, **kw))
        ref = _reference_masked_nll(pred, target, mask, weight=w)
        assert jnp.allclose(out, ref, atol=1e-5, rtol=1e-5), \
            (batch, seq_len, n_classes, str(dtype), weighted, out, ref)

    # module-default small shapes: batch=2, seq_len=8, n_classes=8
    check(2, 8, 8, jnp.float32, weighted=False)       # weight=None path
    check(2, 8, 8, jnp.float32, weighted=True)        # weighted path (fixed)
    check(2, 8, 8, jnp.bfloat16, weighted=False)      # native bf16 streaming
    check(2, 8, 8, jnp.bfloat16, weighted=True)

    # ragged rows/classes + multiple row tiles (overhanging last pred tile)
    check(3, 7, 10, jnp.float32, weighted=False, tile_n=8)
    check(3, 7, 10, jnp.float32, weighted=True, tile_n=8)

    # 2-way split path (per-split partial blocks + duplicated clamped tile)
    check(3, 7, 10, jnp.float32, weighted=False, tile_n=8, n_split=2)

    # multiple class tiles (exercises the j-offset target compare)
    check(2, 16, 256, jnp.float32, weighted=True, tile_n=16, c_tile=128)
    check(2, 16, 256, jnp.bfloat16, weighted=False, tile_n=16, c_tile=128)

    print("KERNEL_OK")
</pallas_src>

<mosaic_0001>
module attributes {stable_mosaic.version = 11 : i64} {
  func.func @_masked_nll_num_kernel(%arg0: i32, %arg1: i32, %arg2: i32, %arg3: memref<16x8xf32, #tpu.memory_space<vmem>>, %arg4: memref<16x1xi32, #tpu.memory_space<vmem>>, %arg5: memref<16x1xf32, #tpu.memory_space<vmem>>, %arg6: memref<1x8x128xf32, #tpu.memory_space<vmem>>) attributes {dimension_semantics = [#tpu.dimension_semantics<parallel>, #tpu.dimension_semantics<arbitrary>, #tpu.dimension_semantics<arbitrary>], iteration_bounds = array<i64: 1, 1, 1>, scalar_prefetch = 0 : i64, scratch_operands = 0 : i64, tpu.core_type = #tpu.core_type<tc>, window_params = [{transform_indices = @transform_0, window_bounds = array<i64: 16, 8>}, {transform_indices = @transform_1, window_bounds = array<i64: 16, 1>}, {transform_indices = @transform_2, window_bounds = array<i64: 16, 1>}, {transform_indices = @transform_3, window_bounds = array<i64: 1, 8, 128>}]} {
    %c0_i32 = arith.constant 0 : i32
    %0 = arith.cmpi eq, %arg1, %c0_i32 : i32
    %c0_i32_0 = arith.constant 0 : i32
    %1 = arith.cmpi eq, %arg2, %c0_i32_0 : i32
    %2 = arith.andi %0, %1 : i1
    %3 = arith.extui %2 : i1 to i32
    %c0_i32_1 = arith.constant 0 : i32
    %4 = arith.cmpi ne, %3, %c0_i32_1 : i32
    scf.if %4 {
      %cst_15 = arith.constant 0.000000e+00 : f32
      %27 = vector.broadcast %cst_15 : f32 to vector<1x8x128xf32>
      %c0_16 = arith.constant 0 : index
      %c0_17 = arith.constant 0 : index
      %c0_18 = arith.constant 0 : index
      %28 = vector.load %arg6[%c0_16, %c0_17, %c0_18] : memref<1x8x128xf32, #tpu.memory_space<vmem>>, vector<1x8x128xf32>
      tpu.vector_store %arg6[%c0_16, %c0_17, %c0_18], %27 {strides = array<i32>} : memref<1x8x128xf32, #tpu.memory_space<vmem>>, vector<1x8x128xf32>,
    } else {
    }
    %c0 = arith.constant 0 : index
    %c0_2 = arith.constant 0 : index
    %5 = vector.load %arg3[%c0, %c0_2] : memref<16x8xf32, #tpu.memory_space<vmem>>, vector<16x8xf32>
    %c0_3 = arith.constant 0 : index
    %c0_4 = arith.constant 0 : index
    %6 = vector.load %arg4[%c0_3, %c0_4] : memref<16x1xi32, #tpu.memory_space<vmem>>, vector<16x1xi32>
    %c8_i32 = arith.constant 8 : i32
    %7 = arith.muli %arg2, %c8_i32 : i32
    %8 = vector.broadcast %7 : i32 to vector<16x1xi32>
    %9 = arith.subi %6, %8 : vector<16x1xi32>
    %10 = tpu.iota {dimensions = array<i32: 1>} : vector<16x8xi32>
    %11 = vector.broadcast %9 : vector<16x1xi32> to vector<16x8xi32>
    %12 = arith.cmpi eq, %10, %11 : vector<16x8xi32>
    %cst = arith.constant 0.000000e+00 : f32
    %13 = vector.broadcast %cst : f32 to vector<16x8xf32>
    %14 = arith.select %12, %5, %13 : vector<16x8xi1>, vector<16x8xf32>
    %cst_5 = arith.constant dense<0.000000e+00> : vector<16xf32>
    %15 = vector.multi_reduction <add>, %14, %cst_5 [1] : vector<16x8xf32> to vector<16xf32>
    %16 = vector.shape_cast %15 : vector<16xf32> to vector<16x1xf32>
    %c0_6 = arith.constant 0 : index
    %c0_7 = arith.constant 0 : index
    %c0_8 = arith.constant 0 : index
    %17 = vector.load %arg6[%c0_6, %c0_7, %c0_8] : memref<1x8x128xf32, #tpu.memory_space<vmem>>, vector<1x8x128xf32>
    %c0_9 = arith.constant 0 : index
    %c0_10 = arith.constant 0 : index
    %18 = vector.load %arg5[%c0_9, %c0_10] : memref<16x1xf32, #tpu.memory_space<vmem>>, vector<16x1xf32>
    %19 = arith.mulf %16, %18 : vector<16x1xf32>
    %20 = vector.shape_cast %19 : vector<16x1xf32> to vector<1x16x1xf32>
    %cst_11 = arith.constant dense<0.000000e+00> : vector<1xf32>
    %21 = vector.multi_reduction <add>, %20, %cst_11 [1, 2] : vector<1x16x1xf32> to vector<1xf32>
    %22 = vector.shape_cast %21 : vector<1xf32> to vector<1x1x1xf32>
    %23 = vector.extract %22[0, 0, 0] : f32 from vector<1x1x1xf32>
    %24 = vector.broadcast %23 : f32 to vector<1x8x128xf32>
    %25 = arith.addf %17, %24 : vector<1x8x128xf32>
    %c0_12 = arith.constant 0 : index
    %c0_13 = arith.constant 0 : index
    %c0_14 = arith.constant 0 : index
    %26 = vector.load %arg6[%c0_12, %c0_13, %c0_14] : memref<1x8x128xf32, #tpu.memory_space<vmem>>, vector<1x8x128xf32>
    tpu.vector_store %arg6[%c0_12, %c0_13, %c0_14], %25 {strides = array<i32>} : memref<1x8x128xf32, #tpu.memory_space<vmem>>, vector<1x8x128xf32>,
    return
  }
  func.func @transform_0(%arg0: i32, %arg1: i32, %arg2: i32) -> (i32, i32) {
    %c1_i32 = arith.constant 1 : i32
    %0 = arith.muli %arg0, %c1_i32 : i32
    %1 = arith.addi %0, %arg1 : i32
    %c0_i32 = arith.constant 0 : i32
    %2 = arith.minsi %1, %c0_i32 : i32
    %c0_i32_0 = arith.constant 0 : i32
    return %2, %arg2 : i32, i32
  }
  func.func @transform_1(%arg0: i32, %arg1: i32, %arg2: i32) -> (i32, i32) {
    %c1_i32 = arith.constant 1 : i32
    %0 = arith.muli %arg0, %c1_i32 : i32
    %1 = arith.addi %0, %arg1 : i32
    %c0_i32 = arith.constant 0 : i32
    %c0_i32_0 = arith.constant 0 : i32
    return %1, %c0_i32 : i32, i32
  }
  func.func @transform_2(%arg0: i32, %arg1: i32, %arg2: i32) -> (i32, i32) {
    %c1_i32 = arith.constant 1 : i32
    %0 = arith.muli %arg0, %c1_i32 : i32
    %1 = arith.addi %0, %arg1 : i32
    %c0_i32 = arith.constant 0 : i32
    %c0_i32_0 = arith.constant 0 : i32
    return %1, %c0_i32 : i32, i32
  }
  func.func @transform_3(%arg0: i32, %arg1: i32, %arg2: i32) -> (i32, i32, i32) {
    %c0_i32 = arith.constant 0 : i32
    %c0_i32_0 = arith.constant 0 : i32
    %c0_i32_1 = arith.constant 0 : i32
    return %arg0, %c0_i32, %c0_i32_0 : i32, i32, i32
  }
}

</mosaic_0001>

<llo_original>
// kernel: tpu_custom_call.1
$region0: #{tpu_custom_call.1}
  #allocation0 [shape = 'u32[]', space=smem, size = 0x4, offset = 0x4, fixed_abs, tag = 'smem constant byte address 0x4 - core index']
  #allocation1 [shape = 'u32[144,128]{1,0:T(1,128)}', space=vmem, size = 0x12000, scoped, tag = 'internal scratch']
  %s0 = inlined_call_operand.vmem [shape: f32[16,8], index: 0, kind: input, shape index: {}]
  %s1 = inlined_call_operand.vmem [shape: s32[16,1], index: 1, kind: input, shape index: {}]
  %s2 = inlined_call_operand.vmem [shape: f32[16,1], index: 2, kind: input, shape index: {}]
  %s3 = inlined_call_operand.hbm [shape: f32[1,8,128], index: 3, kind: output, shape index: {}]
  %s4 = sld [smem:[#allocation0]]
  $region26: #{tpu_custom_call.1} parent=0
    _
  %s6 = ssub.s32 1, %s4
  %s7 = scalar_select 0, %s6, %s4
  $region1: #{tpu_custom_call.1} parent=0
    #allocation2 [shape = 'u8[4096]{0}', space=vmem, size = 0x1000, scoped, tag = 'output window, operand 0, single buffered']
    #allocation3 [shape = 's32[1]{0}', space=sflag, size = 0x4, scoped, tag = 'scoped memory for tpu_custom_call.1']
    %8 = vsyncpa [#allocation3], 0
    // Predicated region
    $region2: #{tpu_custom_call.1} parent=1 // pred_check
      _
    $region3: #{tpu_custom_call.1} parent=1 // pred_check_branch
      %10 = sbr.rel (0) target = $region5
    $region4: #{tpu_custom_call.1} parent=1 // pred_region
      %s11 = sadd.s32 0, 0
      %p12 = scmp.lt.s32.totalorder %s11, 0
      %s13 = scalar_select %p12, %s11, 0
      %s14 = smul.u32 2, %s13
      %p15 = scmp.lt.s32.totalorder %s14, 1
      %s16 = scalar_select %p15, %s14, 1
      %s17 = smul.addr %s16, 8
      %s18 = scalar_lea.vmem %s0, %s17
      %s19 = sadd.s32 0, 0
      %p20 = scmp.lt.s32.totalorder %s19, 0
      %s21 = scalar_select %p20, %s19, 0
      %s22 = smul.u32 2, %s21
    $region5: #{tpu_custom_call.1} parent=1 // pred_fallthru
      _
    // Predicated region
    $region6: #{tpu_custom_call.1} parent=1 // pred_check
      _
    $region7: #{tpu_custom_call.1} parent=1 // pred_check_branch
      %24 = sbr.rel (0) target = $region9
    $region8: #{tpu_custom_call.1} parent=1 // pred_region
      %s25 = sadd.s32 0, 0
      %s26 = smul.u32 2, %s25
      %p27 = scmp.lt.s32.totalorder %s26, 1
      %s28 = scalar_select %p27, %s26, 1
      %s29 = smul.addr %s28, 8
      %s30 = scalar_lea.vmem %s1, %s29
      %s31 = sadd.s32 0, 0
      %s32 = smul.u32 2, %s31
    $region9: #{tpu_custom_call.1} parent=1 // pred_fallthru
      _
    // Predicated region
    $region10: #{tpu_custom_call.1} parent=1 // pred_check
      _
    $region11: #{tpu_custom_call.1} parent=1 // pred_check_branch
      %34 = sbr.rel (0) target = $region13
    $region12: #{tpu_custom_call.1} parent=1 // pred_region
      %s35 = sadd.s32 0, 0
      %s36 = smul.u32 2, %s35
      %p37 = scmp.lt.s32.totalorder %s36, 1
      %s38 = scalar_select %p37, %s36, 1
      %s39 = smul.addr %s38, 8
      %s40 = scalar_lea.vmem %s2, %s39
      %s41 = sadd.s32 0, 0
      %s42 = smul.u32 2, %s41
    $region13: #{tpu_custom_call.1} parent=1 // pred_fallthru
      _
    %s43 = sadd.s32 0, 0
    %p44 = scmp.lt.s32.totalorder %s43, 0
    %s45 = scalar_select %p44, %s43, 0
    %s46 = smul.u32 2, %s45
    %p47 = scmp.lt.s32.totalorder %s46, 1
    %s48 = scalar_select %p47, %s46, 1
    %s49 = smul.addr %s48, 8
    %s50 = scalar_lea.vmem %s0, %s49
    %s51 = sadd.s32 0, 0
    %s52 = smul.u32 2, %s51
    %p53 = scmp.lt.s32.totalorder %s52, 1
    %s54 = scalar_select %p53, %s52, 1
    %s55 = smul.addr %s54, 8
    %s56 = scalar_lea.vmem %s1, %s55
    %s57 = sadd.s32 0, 0
    %s58 = smul.u32 2, %s57
    %p59 = scmp.lt.s32.totalorder %s58, 1
    %s60 = scalar_select %p59, %s58, 1
    %s61 = smul.addr %s60, 8
    %s62 = scalar_lea.vmem %s2, %s61
    %s63 = sadd.s32 0, 0
    %p64 = scmp.lt.s32.totalorder %s63, 0
    %s65 = scalar_select %p64, %s63, 0
    %s66 = smul.u32 2, %s65
    %p67 = scmp.lt.s32.totalorder %s66, 1
    %s68 = scalar_select %p67, %s66, 1
    %s69 = smul.addr %s68, 8
    %s70 = scalar_lea.vmem %s0, %s69
    %s71 = sadd.s32 0, 0
    %p72 = scmp.lt.s32.totalorder %s71, 0
    %s73 = scalar_select %p72, %s71, 0
    %s74 = smul.u32 2, %s73
    %s75 = sadd.s32 0, 0
    %s76 = smul.u32 2, %s75
    %p77 = scmp.lt.s32.totalorder %s76, 1
    %s78 = scalar_select %p77, %s76, 1
    %s79 = smul.addr %s78, 8
    %s80 = scalar_lea.vmem %s1, %s79
    %s81 = sadd.s32 0, 0
    %s82 = smul.u32 2, %s81
    %s83 = sadd.s32 0, 0
    %s84 = smul.u32 2, %s83
    %p85 = scmp.lt.s32.totalorder %s84, 1
    %s86 = scalar_select %p85, %s84, 1
    %s87 = smul.addr %s86, 8
    %s88 = scalar_lea.vmem %s2, %s87
    %s89 = sadd.s32 0, 0
    %s90 = smul.u32 2, %s89
    %p91 = scmp.eq.s32.totalorder 0, 0
    %p92 = scmp.eq.s32.totalorder 0, 0
    %p93 = pnand %p91, %p92
    %p94 = pneg %p93
    // Predicated region
    $region14: #{tpu_custom_call.1} parent=1 // pred_check
      _
    $region15: #{tpu_custom_call.1} parent=1 // pred_check_branch
      %96 = sbr.rel (%p93) target = $region17
    $region16: #{tpu_custom_call.1} parent=1 // pred_region
      %97 = vst [vmem:[#allocation2] sm:$0xff] 0.0
    $region17: #{tpu_custom_call.1} parent=1 // pred_fallthru
      _
    %v98 = vld [vmem:[%s70] sm:$0xff]
    %v99 = vld [vmem:[%s70 + $0x8] sm:$0xff]
    %v100 = vld [vmem:[%s80] sm:$0xff]
    %v101 = vld [vmem:[%s80 + $0x8] sm:$0xff]
    %s102 = smul.u32 0, 8
    %v103 = vstv %s102
    %v104 = vsub.s32 %v100, %v103
    %v105 = vsub.s32 %v101, %v103
    %v106 = vlaneseq
    %v107 = vand.u32 %v106, 127
    %108 = vset.pattern.permute.xlu0 0
    %109 = vperm.xlu0 %108, %v104
    %v110 = vpop.permute.xlu0 %109
    %111 = vset.pattern.permute.xlu0 0
    %112 = vperm.xlu0 %111, %v105
    %v113 = vpop.permute.xlu0 %112
    %vm114 = vcmp.eq.s32.totalorder %v107, %v110
    %vm115 = vcmp.eq.s32.totalorder %v107, %v113
    %v116 = vsel %vm114, %v98, 0.0
    %v117 = vsel %vm115, %v99, 0.0
    %vm118 = vcmask 64512
    %v119 = vsel %vm118, %v116, 0.0
    %120 = vadd.xlane.f32.xlu0 %v119
    %v121 = vpop.xlane.xlu0 %120
    %v122 = vsel %vm118, %v117, 0.0
    %123 = vadd.xlane.f32.xlu0 %v122
    %v124 = vpop.xlane.xlu0 %123
    %v125 = vld [vmem:[#allocation2] sm:$0xff]
    %v126 = vld [vmem:[%s88] sm:$0xff]
    %v127 = vld [vmem:[%s88 + $0x8] sm:$0xff]
    %v128 = vmul.f32 %v121, %v126
    %v129 = vmul.f32 %v124, %v127
    %vm130 = vcmask 7168
    %v131 = vsel %vm130, %v128, 0.0
    %v132 = vsel %vm130, %v129, 0.0
    %v133 = vadd.f32 %v131, %v132
    %134 = vadd.xlane.f32.xlu0 %v133
    %v135 = vpop.xlane.xlu0 %134
    %v136 = vrot.slane %v135, 4
    %v137 = vadd.f32 %v135, %v136
    %v138 = vrot.slane %v137, 2
    %v139 = vadd.f32 %v137, %v138
    %v140 = vrot.slane %v139, 1
    %v141 = vadd.f32 %v139, %v140
    %s142 = vtos %v141
    %v143 = vstv %s142
    %v144 = vadd.f32 %v125, %v143
    %145 = vst [vmem:[#allocation2] sm:$0xff] %v144
    // Predicated region
    $region18: #{tpu_custom_call.1} parent=1 // pred_check
      _
    $region19: #{tpu_custom_call.1} parent=1 // pred_check_branch
      %147 = sbr.rel (0) target = $region21
    $region20: #{tpu_custom_call.1} parent=1 // pred_region
      %s149 = ssub.s32 128, 128
      %150 = vsyncadd [#allocation3], %s149
      %s152 = sshll.u32 [#allocation2], 4
      %s153 = int_to_ptr.vmem [resolvable:$true] %s152
      %155 = dma.vmem_to_hbm [thread:$0]  %s153, 128, %s3, [#allocation3]
    $region21: #{tpu_custom_call.1} parent=1 // pred_fallthru
      _
    // Predicated region
    $region22: #{tpu_custom_call.1} parent=1 // pred_check
      _
    $region23: #{tpu_custom_call.1} parent=1 // pred_check_branch
      %157 = sbr.rel (0) target = $region25
    $region24: #{tpu_custom_call.1} parent=1 // pred_region
      %158 = dma.done [#allocation3], 128
    $region25: #{tpu_custom_call.1} parent=1 // pred_fallthru
      _
    %159 = vsyncpa [#allocation3], 1

</llo_original>
